<compile_context>
chip_gen: v5e
topology: v5e:2x2
jax: 0.10.0
libtpu: 0.0.40
codegen_flags: <defaults>
</compile_context>

<pallas_src>
import functools

import jax
import jax.numpy as jnp
from jax.experimental import pallas as pl
from jax.experimental.pallas import tpu as pltpu

EPS = 1e-7
LANE = 128


def _jaccard_kernel(x_ref, t_ref, out_ref, inter_acc, sp_acc, sg_acc, *,
                    num_classes, block_rows, acc_rows, fold, hw, needs_mask):
    n = pl.program_id(0)
    j = pl.program_id(1)

    @pl.when(jnp.logical_and(n == 0, j == 0))
    def _init():
        inter_acc[...] = jnp.zeros_like(inter_acc)
        sp_acc[...] = jnp.zeros_like(sp_acc)
        sg_acc[...] = jnp.zeros_like(sg_acc)

    x = x_ref[...].astype(jnp.float32)   # (C, block_rows, 128) logits
    t = t_ref[...].astype(jnp.float32)   # (C, block_rows, 128) targets

    # Softmax over the class axis (leading dim): elementwise max/exp/add across
    # C dense (rows, 128) slabs -> VPU/EUP only, no cross-lane work here.
    m = jnp.max(x, axis=0, keepdims=True)                 # (1, rows, 128)
    e = jnp.exp(x - m)                                    # (C, rows, 128) EUP
    denom = jnp.sum(e, axis=0, keepdims=True)             # (1, rows, 128)
    # NOTE(review #8): approx=True would move the divide to the idle EUP slot,
    # but its relative error is too coarse for the 1e-5 test tolerance; after
    # removing the full-tile accumulators the kernel is HBM-bound, so the
    # exact divide is not on the critical slot.
    pr = e * pl.reciprocal(denom, approx=False)           # (C, rows, 128)

    def _fold(v):
        # Tile-aligned fold of the row axis down to acc_rows sublanes:
        # pure vreg adds (no XLU).
        if fold == 1:
            return v
        return jnp.sum(v.reshape(num_classes, fold, acc_rows, LANE), axis=1)

    def _accumulate(pr_v, t_v):
        inter_acc[...] += _fold(pr_v * t_v)
        sp_acc[...] += _fold(pr_v)
        sg_acc[...] += _fold(t_v)

    if needs_mask:
        is_tail = j == pl.num_programs(1) - 1

        @pl.when(jnp.logical_not(is_tail))
        def _body():
            _accumulate(pr, t)

        @pl.when(is_tail)
        def _tail():
            # Only the last pixel tile contains padded / out-of-range pixels.
            shape = (num_classes, block_rows, LANE)
            r_idx = jax.lax.broadcasted_iota(jnp.int32, shape, 1)
            l_idx = jax.lax.broadcasted_iota(jnp.int32, shape, 2)
            pix = (j * block_rows + r_idx) * LANE + l_idx
            valid = pix < hw
            _accumulate(jnp.where(valid, pr, 0.0), jnp.where(valid, t, 0.0))
    else:
        _accumulate(pr, t)

    @pl.when(jnp.logical_and(n == pl.num_programs(0) - 1,
                             j == pl.num_programs(1) - 1))
    def _finalize():
        def _total(acc):   # (C, acc_rows, 128) -> (C, 1, 1); single XLU reduce
            return jnp.sum(jnp.sum(acc[...], axis=2, keepdims=True),
                           axis=1, keepdims=True)
        inter = _total(inter_acc)
        sp = _total(sp_acc)
        sg = _total(sg_acc)
        union = sp + sg - inter + EPS
        one_minus = 1.0 - (inter + EPS) / union            # (C, 1, 1)
        # Skip background class 0 (the forward loop starts at class 1).
        cls_idx = jax.lax.broadcasted_iota(jnp.int32, one_minus.shape, 0)
        loss = jnp.sum(jnp.where(cls_idx >= 1, one_minus, 0.0))
        out_ref[0, 0] = loss


def jaccard_loss(logits_nchw, target_nchw, block_rows=None,
                 vmem_limit_bytes=None):
    N, C, H, W = logits_nchw.shape
    assert target_nchw.shape == (N, C, H, W)
    HW = H * W

    # Free reshape only: classes stay the leading compute axis.
    x = logits_nchw.reshape(N, C, HW)
    t = target_nchw.reshape(N, C, HW)

    # Pack pixels onto (sublane, lane).  Pad HW up to a lane multiple (rare,
    # at most 127 pixels) so the 4-D view below is a free reshape.
    HW_pad = ((HW + LANE - 1) // LANE) * LANE
    if HW_pad != HW:
        pad = ((0, 0), (0, 0), (0, HW_pad - HW))
        x = jnp.pad(x, pad)
        t = jnp.pad(t, pad)
    rows_total = HW_pad // LANE
    x = x.reshape(N, C, rows_total, LANE)
    t = t.reshape(N, C, rows_total, LANE)

    # Generation-aware VMEM budget: scoped limit = min(capacity/2, 64 MiB);
    # pipelining budget = half of that (double-buffered inputs + f32 temps).
    if vmem_limit_bytes is None:
        try:
            cap = pltpu.get_tpu_info().vmem_capacity_bytes
        except Exception:
            cap = 64 * 1024 * 1024          # conservative (v7x physical)
        vmem_limit_bytes = min(cap // 2, 64 * 1024 * 1024)
    budget = vmem_limit_bytes // 2
    # Resident bytes per pixel: 2x-buffered logits+target blocks plus ~4
    # compiler-materialized f32 temporaries (x_f32, e, pr, pr*t).
    bytes_per_px = (2 * C * (x.dtype.itemsize + t.dtype.itemsize)
                    + 4 * C * 4)
    if block_rows is None:
        block_rows = max(8, (budget // (bytes_per_px * LANE)) // 8 * 8)
    block_rows = min(int(block_rows), rows_total)
    if block_rows != rows_total and block_rows % 8 != 0:
        raise ValueError("block_rows must be a multiple of 8 "
                         "(or cover all rows of H*W//128)")

    if block_rows % 8 == 0:
        fold, acc_rows = block_rows // 8, 8
    else:                                   # tiny image: single short block
        fold, acc_rows = 1, block_rows

    num_j = pl.cdiv(rows_total, block_rows)
    needs_mask = (num_j * block_rows * LANE) > HW

    kernel = functools.partial(
        _jaccard_kernel, num_classes=C, block_rows=block_rows,
        acc_rows=acc_rows, fold=fold, hw=HW, needs_mask=needs_mask)

    out = pl.pallas_call(
        kernel,
        out_shape=jax.ShapeDtypeStruct((1, 1), jnp.float32),
        grid_spec=pltpu.PrefetchScalarGridSpec(
            num_scalar_prefetch=0,
            grid=(N, num_j),
            in_specs=[
                pl.BlockSpec((None, C, block_rows, LANE),
                             lambda n, j: (n, 0, j, 0)),
                pl.BlockSpec((None, C, block_rows, LANE),
                             lambda n, j: (n, 0, j, 0)),
            ],
            out_specs=pl.BlockSpec(memory_space=pltpu.SMEM),
            scratch_shapes=[
                pltpu.VMEM((C, acc_rows, LANE), jnp.float32),
                pltpu.VMEM((C, acc_rows, LANE), jnp.float32),
                pltpu.VMEM((C, acc_rows, LANE), jnp.float32),
            ],
        ),
        compiler_params=pltpu.CompilerParams(
            # Accumulators are carried across the whole grid -> sequential.
            dimension_semantics=("arbitrary", "arbitrary"),
            vmem_limit_bytes=int(vmem_limit_bytes),
        ),
    )(x, t)
    return out[0, 0]


def jaccard_loss_ref(logits_nchw, target_nchw):
    # Plain-JAX reference mirroring the PyTorch forward.
    pr = jax.nn.softmax(logits_nchw.astype(jnp.float32), axis=1)
    gt = target_nchw.astype(jnp.float32)
    loss = 0.0
    for i in range(1, logits_nchw.shape[1]):
        ypr = pr[:, i]
        ygt = gt[:, i]
        inter = jnp.sum(ypr * ygt)
        union = jnp.sum(ypr) + jnp.sum(ygt) - inter + EPS
        loss += 1.0 - (inter + EPS) / union
    return loss


def _make_inputs(key, N, C, H, W, logits_dtype=jnp.float32,
                 target_dtype=jnp.float32):
    k1, k2 = jax.random.split(key)
    logits = jax.random.normal(k1, (N, C, H, W), jnp.float32).astype(logits_dtype)
    labels = jax.random.randint(k2, (N, H, W), 0, C)
    target = jnp.transpose(
        jax.nn.one_hot(labels, C, dtype=target_dtype), (0, 3, 1, 2))
    return logits, target


if __name__ == "__main__":
    key = jax.random.PRNGKey(0)
    k1, k2, k3 = jax.random.split(key, 3)

    # class_weights / threshold of the PyTorch module are stored but unused in
    # its forward; nothing to port.

    # 1) Module-typical small shape (HW = 256 -> single dense 2x128 block).
    N, C, H, W = 2, 4, 16, 16
    logits, target = _make_inputs(k1, N, C, H, W)
    loss = jax.block_until_ready(jaccard_loss(logits, target))
    ref = jax.block_until_ready(jaccard_loss_ref(logits, target))
    assert jnp.allclose(loss, ref, rtol=1e-5, atol=1e-5), (loss, ref)

    # 2) Non-lane-aligned spatial size (HW = 144): exercises the pad + masked
    #    tail path.
    logits2, target2 = _make_inputs(k2, 2, 4, 12, 12)
    loss2 = jax.block_until_ready(jaccard_loss(logits2, target2))
    ref2 = jax.block_until_ready(jaccard_loss_ref(logits2, target2))
    assert jnp.allclose(loss2, ref2, rtol=1e-5, atol=1e-5), (loss2, ref2)

    # 3) Multi-tile grid with fold > 1 and a partial last tile, plus bf16
    #    logits/targets (narrow HBM streams): HW = 2304 -> 18 rows, block 16.
    logits3, target3 = _make_inputs(k3, 2, 4, 48, 48,
                                    logits_dtype=jnp.bfloat16,
                                    target_dtype=jnp.bfloat16)
    loss3 = jax.block_until_ready(jaccard_loss(logits3, target3, block_rows=16))
    ref3 = jax.block_until_ready(jaccard_loss_ref(logits3, target3))
    assert jnp.allclose(loss3, ref3, rtol=1e-5, atol=1e-5), (loss3, ref3)

    print("KERNEL_OK")
</pallas_src>

<mosaic_0001>
module attributes {stable_mosaic.version = 11 : i64} {
  func.func @_jaccard_kernel(%arg0: i32, %arg1: i32, %arg2: memref<1x4x2x128xf32, #tpu.memory_space<vmem>>, %arg3: memref<1x4x2x128xf32, #tpu.memory_space<vmem>>, %arg4: memref<1x1xf32, #tpu.memory_space<smem>>, %arg5: memref<4x2x128xf32, #tpu.memory_space<vmem>>, %arg6: memref<4x2x128xf32, #tpu.memory_space<vmem>>, %arg7: memref<4x2x128xf32, #tpu.memory_space<vmem>>) attributes {dimension_semantics = [#tpu.dimension_semantics<arbitrary>, #tpu.dimension_semantics<arbitrary>], iteration_bounds = array<i64: 2, 1>, scalar_prefetch = 0 : i64, scratch_operands = 3 : i64, tpu.core_type = #tpu.core_type<tc>, window_params = [{transform_indices = @transform_0, window_bounds = array<i64: 1, 4, 2, 128>}, {transform_indices = @transform_1, window_bounds = array<i64: 1, 4, 2, 128>}, {transform_indices = @transform_2, window_bounds = array<i64: 1, 1>}]} {
    %c0_i32 = arith.constant 0 : i32
    %0 = arith.cmpi eq, %arg0, %c0_i32 : i32
    %c0_i32_0 = arith.constant 0 : i32
    %1 = arith.cmpi eq, %arg1, %c0_i32_0 : i32
    %2 = arith.andi %0, %1 : i1
    %3 = arith.extui %2 : i1 to i32
    %c0_i32_1 = arith.constant 0 : i32
    %4 = arith.cmpi ne, %3, %c0_i32_1 : i32
    scf.if %4 {
      %cst_30 = arith.constant 0.000000e+00 : f32
      %34 = vector.broadcast %cst_30 : f32 to vector<4x2x128xf32>
      %c0_31 = arith.constant 0 : index
      %c0_32 = arith.constant 0 : index
      %c0_33 = arith.constant 0 : index
      %35 = vector.load %arg5[%c0_31, %c0_32, %c0_33] : memref<4x2x128xf32, #tpu.memory_space<vmem>>, vector<4x2x128xf32>
      tpu.vector_store %arg5[%c0_31, %c0_32, %c0_33], %34 {strides = array<i32>} : memref<4x2x128xf32, #tpu.memory_space<vmem>>, vector<4x2x128xf32>,
      %cst_34 = arith.constant 0.000000e+00 : f32
      %36 = vector.broadcast %cst_34 : f32 to vector<4x2x128xf32>
      %c0_35 = arith.constant 0 : index
      %c0_36 = arith.constant 0 : index
      %c0_37 = arith.constant 0 : index
      %37 = vector.load %arg6[%c0_35, %c0_36, %c0_37] : memref<4x2x128xf32, #tpu.memory_space<vmem>>, vector<4x2x128xf32>
      tpu.vector_store %arg6[%c0_35, %c0_36, %c0_37], %36 {strides = array<i32>} : memref<4x2x128xf32, #tpu.memory_space<vmem>>, vector<4x2x128xf32>,
      %cst_38 = arith.constant 0.000000e+00 : f32
      %38 = vector.broadcast %cst_38 : f32 to vector<4x2x128xf32>
      %c0_39 = arith.constant 0 : index
      %c0_40 = arith.constant 0 : index
      %c0_41 = arith.constant 0 : index
      %39 = vector.load %arg7[%c0_39, %c0_40, %c0_41] : memref<4x2x128xf32, #tpu.memory_space<vmem>>, vector<4x2x128xf32>
      tpu.vector_store %arg7[%c0_39, %c0_40, %c0_41], %38 {strides = array<i32>} : memref<4x2x128xf32, #tpu.memory_space<vmem>>, vector<4x2x128xf32>,
    } else {
    }
    %c0 = arith.constant 0 : index
    %c0_2 = arith.constant 0 : index
    %c0_3 = arith.constant 0 : index
    %c0_4 = arith.constant 0 : index
    %5 = vector.load %arg2[%c0, %c0_2, %c0_3, %c0_4] : memref<1x4x2x128xf32, #tpu.memory_space<vmem>>, vector<1x4x2x128xf32>
    %6 = vector.shape_cast %5 : vector<1x4x2x128xf32> to vector<4x2x128xf32>
    %c0_5 = arith.constant 0 : index
    %c0_6 = arith.constant 0 : index
    %c0_7 = arith.constant 0 : index
    %c0_8 = arith.constant 0 : index
    %7 = vector.load %arg3[%c0_5, %c0_6, %c0_7, %c0_8] : memref<1x4x2x128xf32, #tpu.memory_space<vmem>>, vector<1x4x2x128xf32>
    %8 = vector.shape_cast %7 : vector<1x4x2x128xf32> to vector<4x2x128xf32>
    %cst = arith.constant dense<0xFF800000> : vector<2x128xf32>
    %9 = vector.multi_reduction <maximumf>, %6, %cst [0] : vector<4x2x128xf32> to vector<2x128xf32>
    %10 = vector.shape_cast %9 : vector<2x128xf32> to vector<1x2x128xf32>
    %11 = vector.broadcast %10 : vector<1x2x128xf32> to vector<4x2x128xf32>
    %12 = arith.subf %6, %11 : vector<4x2x128xf32>
    %13 = math.exp %12 : vector<4x2x128xf32>
    %cst_9 = arith.constant dense<0.000000e+00> : vector<2x128xf32>
    %14 = vector.multi_reduction <add>, %13, %cst_9 [0] : vector<4x2x128xf32> to vector<2x128xf32>
    %15 = vector.shape_cast %14 : vector<2x128xf32> to vector<1x2x128xf32>
    %16 = tpu.reciprocal %15 : vector<1x2x128xf32> -> vector<1x2x128xf32>
    %17 = vector.broadcast %16 : vector<1x2x128xf32> to vector<4x2x128xf32>
    %18 = arith.mulf %13, %17 : vector<4x2x128xf32>
    %c0_10 = arith.constant 0 : index
    %c0_11 = arith.constant 0 : index
    %c0_12 = arith.constant 0 : index
    %19 = vector.load %arg5[%c0_10, %c0_11, %c0_12] : memref<4x2x128xf32, #tpu.memory_space<vmem>>, vector<4x2x128xf32>
    %20 = arith.mulf %18, %8 : vector<4x2x128xf32>
    %21 = arith.addf %19, %20 : vector<4x2x128xf32>
    %c0_13 = arith.constant 0 : index
    %c0_14 = arith.constant 0 : index
    %c0_15 = arith.constant 0 : index
    %22 = vector.load %arg5[%c0_13, %c0_14, %c0_15] : memref<4x2x128xf32, #tpu.memory_space<vmem>>, vector<4x2x128xf32>
    tpu.vector_store %arg5[%c0_13, %c0_14, %c0_15], %21 {strides = array<i32>} : memref<4x2x128xf32, #tpu.memory_space<vmem>>, vector<4x2x128xf32>,
    %c0_16 = arith.constant 0 : index
    %c0_17 = arith.constant 0 : index
    %c0_18 = arith.constant 0 : index
    %23 = vector.load %arg6[%c0_16, %c0_17, %c0_18] : memref<4x2x128xf32, #tpu.memory_space<vmem>>, vector<4x2x128xf32>
    %24 = arith.addf %23, %18 : vector<4x2x128xf32>
    %c0_19 = arith.constant 0 : index
    %c0_20 = arith.constant 0 : index
    %c0_21 = arith.constant 0 : index
    %25 = vector.load %arg6[%c0_19, %c0_20, %c0_21] : memref<4x2x128xf32, #tpu.memory_space<vmem>>, vector<4x2x128xf32>
    tpu.vector_store %arg6[%c0_19, %c0_20, %c0_21], %24 {strides = array<i32>} : memref<4x2x128xf32, #tpu.memory_space<vmem>>, vector<4x2x128xf32>,
    %c0_22 = arith.constant 0 : index
    %c0_23 = arith.constant 0 : index
    %c0_24 = arith.constant 0 : index
    %26 = vector.load %arg7[%c0_22, %c0_23, %c0_24] : memref<4x2x128xf32, #tpu.memory_space<vmem>>, vector<4x2x128xf32>
    %27 = arith.addf %26, %8 : vector<4x2x128xf32>
    %c0_25 = arith.constant 0 : index
    %c0_26 = arith.constant 0 : index
    %c0_27 = arith.constant 0 : index
    %28 = vector.load %arg7[%c0_25, %c0_26, %c0_27] : memref<4x2x128xf32, #tpu.memory_space<vmem>>, vector<4x2x128xf32>
    tpu.vector_store %arg7[%c0_25, %c0_26, %c0_27], %27 {strides = array<i32>} : memref<4x2x128xf32, #tpu.memory_space<vmem>>, vector<4x2x128xf32>,
    %c1_i32 = arith.constant 1 : i32
    %29 = arith.cmpi eq, %arg0, %c1_i32 : i32
    %c0_i32_28 = arith.constant 0 : i32
    %30 = arith.cmpi eq, %arg1, %c0_i32_28 : i32
    %31 = arith.andi %29, %30 : i1
    %32 = arith.extui %31 : i1 to i32
    %c0_i32_29 = arith.constant 0 : i32
    %33 = arith.cmpi ne, %32, %c0_i32_29 : i32
    scf.if %33 {
      %c0_30 = arith.constant 0 : index
      %c0_31 = arith.constant 0 : index
      %c0_32 = arith.constant 0 : index
      %34 = vector.load %arg5[%c0_30, %c0_31, %c0_32] : memref<4x2x128xf32, #tpu.memory_space<vmem>>, vector<4x2x128xf32>
      %cst_33 = arith.constant dense<0.000000e+00> : vector<4x2xf32>
      %35 = vector.multi_reduction <add>, %34, %cst_33 [2] : vector<4x2x128xf32> to vector<4x2xf32>
      %36 = vector.shape_cast %35 : vector<4x2xf32> to vector<4x2x1xf32>
      %cst_34 = arith.constant dense<0.000000e+00> : vector<4x1xf32>
      %37 = vector.multi_reduction <add>, %36, %cst_34 [1] : vector<4x2x1xf32> to vector<4x1xf32>
      %38 = vector.shape_cast %37 : vector<4x1xf32> to vector<4x1x1xf32>
      %c0_35 = arith.constant 0 : index
      %c0_36 = arith.constant 0 : index
      %c0_37 = arith.constant 0 : index
      %39 = vector.load %arg6[%c0_35, %c0_36, %c0_37] : memref<4x2x128xf32, #tpu.memory_space<vmem>>, vector<4x2x128xf32>
      %cst_38 = arith.constant dense<0.000000e+00> : vector<4x2xf32>
      %40 = vector.multi_reduction <add>, %39, %cst_38 [2] : vector<4x2x128xf32> to vector<4x2xf32>
      %41 = vector.shape_cast %40 : vector<4x2xf32> to vector<4x2x1xf32>
      %cst_39 = arith.constant dense<0.000000e+00> : vector<4x1xf32>
      %42 = vector.multi_reduction <add>, %41, %cst_39 [1] : vector<4x2x1xf32> to vector<4x1xf32>
      %43 = vector.shape_cast %42 : vector<4x1xf32> to vector<4x1x1xf32>
      %c0_40 = arith.constant 0 : index
      %c0_41 = arith.constant 0 : index
      %c0_42 = arith.constant 0 : index
      %44 = vector.load %arg7[%c0_40, %c0_41, %c0_42] : memref<4x2x128xf32, #tpu.memory_space<vmem>>, vector<4x2x128xf32>
      %cst_43 = arith.constant dense<0.000000e+00> : vector<4x2xf32>
      %45 = vector.multi_reduction <add>, %44, %cst_43 [2] : vector<4x2x128xf32> to vector<4x2xf32>
      %46 = vector.shape_cast %45 : vector<4x2xf32> to vector<4x2x1xf32>
      %cst_44 = arith.constant dense<0.000000e+00> : vector<4x1xf32>
      %47 = vector.multi_reduction <add>, %46, %cst_44 [1] : vector<4x2x1xf32> to vector<4x1xf32>
      %48 = vector.shape_cast %47 : vector<4x1xf32> to vector<4x1x1xf32>
      %49 = arith.addf %43, %48 : vector<4x1x1xf32>
      %50 = arith.subf %49, %38 : vector<4x1x1xf32>
      %cst_45 = arith.constant 1.000000e-07 : f32
      %51 = vector.broadcast %cst_45 : f32 to vector<4x1x1xf32>
      %52 = arith.addf %50, %51 : vector<4x1x1xf32>
      %cst_46 = arith.constant 1.000000e-07 : f32
      %53 = vector.broadcast %cst_46 : f32 to vector<4x1x1xf32>
      %54 = arith.addf %38, %53 : vector<4x1x1xf32>
      %55 = arith.divf %54, %52 : vector<4x1x1xf32>
      %cst_47 = arith.constant 1.000000e+00 : f32
      %56 = vector.broadcast %cst_47 : f32 to vector<4x1x1xf32>
      %57 = arith.subf %56, %55 : vector<4x1x1xf32>
      %58 = tpu.iota {dimensions = array<i32: 0>} : vector<4x1x1xi32>
      %c1_i32_48 = arith.constant 1 : i32
      %59 = vector.broadcast %c1_i32_48 : i32 to vector<4x1x1xi32>
      %60 = arith.cmpi sge, %58, %59 : vector<4x1x1xi32>
      %cst_49 = arith.constant 0.000000e+00 : f32
      %61 = vector.broadcast %cst_49 : f32 to vector<4x1x1xf32>
      %62 = arith.select %60, %57, %61 : vector<4x1x1xi1>, vector<4x1x1xf32>
      %63 = vector.shape_cast %62 : vector<4x1x1xf32> to vector<1x4x1x1xf32>
      %cst_50 = arith.constant dense<0.000000e+00> : vector<1xf32>
      %64 = vector.multi_reduction <add>, %63, %cst_50 [1, 2, 3] : vector<1x4x1x1xf32> to vector<1xf32>
      %65 = vector.shape_cast %64 : vector<1xf32> to vector<1x1x1x1xf32>
      %66 = vector.extract %65[0, 0, 0, 0] : f32 from vector<1x1x1x1xf32>
      %c0_51 = arith.constant 0 : index
      %c0_52 = arith.constant 0 : index
      %67 = memref.load %arg4[%c0_51, %c0_52] : memref<1x1xf32, #tpu.memory_space<smem>>
      memref.store %66, %arg4[%c0_51, %c0_52] : memref<1x1xf32, #tpu.memory_space<smem>>
    } else {
    }
    return
  }
  func.func @transform_0(%arg0: i32, %arg1: i32) -> (i32, i32, i32, i32) {
    %c0_i32 = arith.constant 0 : i32
    %c0_i32_0 = arith.constant 0 : i32
    %c0_i32_1 = arith.constant 0 : i32
    return %arg0, %c0_i32, %arg1, %c0_i32_0 : i32, i32, i32, i32
  }
  func.func @transform_1(%arg0: i32, %arg1: i32) -> (i32, i32, i32, i32) {
    %c0_i32 = arith.constant 0 : i32
    %c0_i32_0 = arith.constant 0 : i32
    %c0_i32_1 = arith.constant 0 : i32
    return %arg0, %c0_i32, %arg1, %c0_i32_0 : i32, i32, i32, i32
  }
  func.func @transform_2(%arg0: i32, %arg1: i32) -> (i32, i32) {
    %c0_i32 = arith.constant 0 : i32
    %c0_i32_0 = arith.constant 0 : i32
    %c0_i32_1 = arith.constant 0 : i32
    return %c0_i32, %c0_i32_0 : i32, i32
  }
}

</mosaic_0001>

<llo_original>
// kernel: tpu_custom_call.1
$region0: #{tpu_custom_call.1}
  #allocation0 [shape = 'u32[]', space=smem, size = 0x4, offset = 0x4, fixed_abs, tag = 'smem constant byte address 0x4 - core index']
  #allocation1 [shape = 'u32[72,128]{1,0:T(1,128)}', space=vmem, size = 0x9000, scoped, tag = 'internal scratch']
  #allocation2 [shape = 'f32[4,2,128]{2,1,0:T(2,128)}', space=vmem, size = 0x1000, scoped, tag = 'scratch operand']
  #allocation3 [shape = 'f32[4,2,128]{2,1,0:T(2,128)}', space=vmem, size = 0x1000, scoped, tag = 'scratch operand']
  #allocation4 [shape = 'f32[4,2,128]{2,1,0:T(2,128)}', space=vmem, size = 0x1000, scoped, tag = 'scratch operand']
  %s0 = inlined_call_operand.hbm [shape: f32[2,4,2,128], index: 0, kind: input, shape index: {}]
  %s1 = inlined_call_operand.hbm [shape: f32[2,4,2,128], index: 1, kind: input, shape index: {}]
  %s2 = inlined_call_operand.hbm [shape: f32[1,1], index: 2, kind: output, shape index: {}]
  %s3 = sld [smem:[#allocation0]]
  $region57: #{tpu_custom_call.1} parent=0
    _
  %s5 = ssub.s32 1, %s3
  %s6 = scalar_select 0, %s5, %s3
  $region1: #{tpu_custom_call.1} parent=0
    #allocation5 [shape = 'u8[8192]{0}', space=vmem, size = 0x2000, scoped, tag = 'input window, operand 0']
    #allocation6 [shape = 's32[2]{0}', space=sflag, size = 0x8, scoped, tag = 'scoped memory for tpu_custom_call.1']
    #allocation7 [shape = 's32[2]{0}', space=sflag, size = 0x8, scoped, tag = 'scoped memory for tpu_custom_call.1']
    #allocation8 [shape = 'u8[8192]{0}', space=vmem, size = 0x2000, scoped, tag = 'input window, operand 1']
    #allocation9 [shape = 's32[2]{0}', space=sflag, size = 0x8, scoped, tag = 'scoped memory for tpu_custom_call.1']
    #allocation10 [shape = 'u8[512]{0}', space=smem, size = 0x200, scoped, tag = 'output window, operand 0, single buffered']
    %7 = vsyncpa [#allocation6], 0
    %s8 = scalar_lea.sflag [#allocation6], 1
    %9 = vsyncpa %s8, 0
    %10 = vsyncpa [#allocation9], 0
    %s11 = scalar_lea.sflag [#allocation9], 1
    %12 = vsyncpa %s11, 0
    %13 = vsyncpa [#allocation7], 0
    loop: start=0, step=1, limit=4
    $region2: #{tpu_custom_call.1} parent=1 // loop_pre_header
      _
    $region3: #{tpu_custom_call.1} parent=1 // loop_header
      %s15 = sphi 0, %s19
      %p16 = scmp.ge.s32.totalorder %s15, 4
      %s22 = sphi 0, %s34
      %s23 = sphi 0, %s30
      %s24 = sphi 0, %s22
      %s25 = sphi 0, %s23
      %s26 = sphi 0, %s24
      %s27 = sphi 0, %s25
      %s39 = sphi 0, %s41
      %s42 = sphi 0, %s39
      %s43 = sphi 0, %s42
      %s59 = sphi 0, %s43
      %s67 = sphi 0, %s69
      %s70 = sphi 0, %s67
      %s71 = sphi 0, %s70
      %s87 = sphi 0, %s71
      %s91 = sphi 0, %s91
      %s93 = sphi 0, %s91
      %s94 = sphi 0, %s93
      %s108 = sphi 0, %s94
    $region4: #{tpu_custom_call.1} parent=1 // loop_header_branch
      %18 = sbr.rel (%p16) target = $region8
    $region5: #{tpu_custom_call.1} parent=1 // loop_body
      %s20 = ssub.s32 %s15, 1
      %s21 = ssub.s32 %s15, 2
      %s28 = sadd.s32 1, %s23
      %p29 = scmp.ge.s32.totalorder %s28, 1
      %s30 = scalar_select %p29, 0, %s28
      %s31 = sadd.s32 1, %s22
      %s32 = scalar_select %p29, %s31, %s22
      %p33 = scmp.ge.s32.totalorder %s32, 2
      %s34 = scalar_select %p33, 0, %s32
      %s35 = ssub.s32 %s22, %s34
      %s36 = ssub.s32 %s23, %s30
      %s37 = sor.u32 %s35, %s36
      %p38 = scmp.eq.s32.totalorder %s37, 0
      %s40 = sadd.s32 %s39, 1
      %s41 = scalar_select %p38, %s39, %s40
      %p44 = pneg %p38
      %p45 = scmp.eq.s32.totalorder %s15, 1
      %p46 = por %p44, %p45
      %p47 = scmp.ne.s32.totalorder %s39, %s42
      %p48 = scmp.eq.s32.totalorder %s15, 0
      %p49 = por %p47, %p48
      %p50 = scmp.ne.s32.totalorder %s39, %s42
      %p51 = scmp.eq.s32.totalorder %s20, 1
      %p52 = por %p50, %p51
      %p53 = scmp.ne.s32.totalorder %s42, %s43
      %p54 = scmp.eq.s32.totalorder %s20, 0
      %p55 = por %p53, %p54
      %p56 = scmp.ne.s32.totalorder %s42, %s43
      %p57 = scmp.eq.s32.totalorder %s21, 1
      %p58 = por %p56, %p57
      %p60 = scmp.ne.s32.totalorder %s43, %s59
      %p61 = scmp.eq.s32.totalorder %s21, 0
      %p62 = por %p60, %p61
      %s63 = ssub.s32 %s22, %s34
      %s64 = ssub.s32 %s23, %s30
      %s65 = sor.u32 %s63, %s64
      %p66 = scmp.eq.s32.totalorder %s65, 0
      %s68 = sadd.s32 %s67, 1
      %s69 = scalar_select %p66, %s67, %s68
      %p72 = pneg %p66
      %p73 = scmp.eq.s32.totalorder %s15, 1
      %p74 = por %p72, %p73
      %p75 = scmp.ne.s32.totalorder %s67, %s70
      %p76 = scmp.eq.s32.totalorder %s15, 0
      %p77 = por %p75, %p76
      %p78 = scmp.ne.s32.totalorder %s67, %s70
      %p79 = scmp.eq.s32.totalorder %s20, 1
      %p80 = por %p78, %p79
      %p81 = scmp.ne.s32.totalorder %s70, %s71
      %p82 = scmp.eq.s32.totalorder %s20, 0
      %p83 = por %p81, %p82
      %p84 = scmp.ne.s32.totalorder %s70, %s71
      %p85 = scmp.eq.s32.totalorder %s21, 1
      %p86 = por %p84, %p85
      %p88 = scmp.ne.s32.totalorder %s71, %s87
      %p89 = scmp.eq.s32.totalorder %s21, 0
      %p90 = por %p88, %p89
      %s92 = sadd.s32 %s91, 1
      %p95 = scmp.eq.s32.totalorder %s15, 1
      %p96 = scmp.ne.s32.totalorder %s91, %s93
      %p97 = scmp.eq.s32.totalorder %s15, 0
      %p98 = por %p96, %p97
      %p99 = scmp.ne.s32.totalorder %s91, %s93
      %p100 = scmp.eq.s32.totalorder %s20, 1
      %p101 = por %p99, %p100
      %p102 = scmp.ne.s32.totalorder %s93, %s94
      %p103 = scmp.eq.s32.totalorder %s20, 0
      %p104 = por %p102, %p103
      %p105 = scmp.ne.s32.totalorder %s93, %s94
      %p106 = scmp.eq.s32.totalorder %s21, 1
      %p107 = por %p105, %p106
      %p109 = scmp.ne.s32.totalorder %s94, %s108
      %p110 = scmp.eq.s32.totalorder %s21, 0
      %p111 = por %p109, %p110
      %p112 = scmp.le.s32.totalorder 1, %s15
      %p113 = scmp.lt.s32.totalorder %s15, 3
      %p114 = pnand %p112, %p113
      %p115 = pneg %p114
      // Predicated region
      $region9: #{tpu_custom_call.1} parent=5 // pred_check
        _
      $region10: #{tpu_custom_call.1} parent=5 // pred_check_branch
        %117 = sbr.rel (%p114) target = $region12
      $region11: #{tpu_custom_call.1} parent=5 // pred_region
        %s118 = ssub.s32 %s15, 1
      $region12: #{tpu_custom_call.1} parent=5 // pred_fallthru
        _
      %p119 = scmp.lt.s32.totalorder %s15, 2
      // Predicated region
      $region13: #{tpu_custom_call.1} parent=5 // pred_check
        %p120 = pneg %p119
      $region14: #{tpu_custom_call.1} parent=5 // pred_check_branch
        %122 = sbr.rel (%p120) target = $region16
      $region15: #{tpu_custom_call.1} parent=5 // pred_region
        // Predicated region
        $region17: #{tpu_custom_call.1} parent=15 // pred_check
          %p123 = pneg %p49
        $region18: #{tpu_custom_call.1} parent=15 // pred_check_branch
          %125 = sbr.rel (%p123) target = $region20
        $region19: #{tpu_custom_call.1} parent=15 // pred_region
          %s126 = sand.u32 %s39, 1
          %s127 = scalar_lea.sflag [#allocation6], %s126
          %s128 = sand.u32 %s39, 1
          %s129 = smul.addr %s128, 8
          %s130 = scalar_lea.vmem [#allocation5], %s129
          %132 = vsyncadd %s127, 0
          %s133 = smul.addr %s22, 4
          %s134 = sadd.s32 %s23, %s133
          %s135 = smul.addr %s134, 2
          %s136 = scalar_lea.hbm %s0, %s135
          %s137 = sshll.u32 %s136, 4
          %s138 = int_to_ptr.hbm [resolvable:$true] %s137
          %s139 = sshll.u32 %s130, 4
          %s140 = int_to_ptr.vmem [resolvable:$true] %s139
          %145 = dma.hbm_to_vmem [thread:$0]  %s138, 128, %s140, %s127, 32, 32, 2
        $region20: #{tpu_custom_call.1} parent=15 // pred_fallthru
          _
        // Predicated region
        $region21: #{tpu_custom_call.1} parent=15 // pred_check
          %p146 = pneg %p77
        $region22: #{tpu_custom_call.1} parent=15 // pred_check_branch
          %148 = sbr.rel (%p146) target = $region24
        $region23: #{tpu_custom_call.1} parent=15 // pred_region
          %s149 = sand.u32 %s67, 1
          %s150 = scalar_lea.sflag [#allocation9], %s149
          %s151 = sand.u32 %s67, 1
          %s152 = smul.addr %s151, 8
          %s153 = scalar_lea.vmem [#allocation8], %s152
          %155 = vsyncadd %s150, 0
          %s156 = smul.addr %s22, 4
          %s157 = sadd.s32 %s23, %s156
          %s158 = smul.addr %s157, 2
          %s159 = scalar_lea.hbm %s1, %s158
          %s160 = sshll.u32 %s159, 4
          %s161 = int_to_ptr.hbm [resolvable:$true] %s160
          %s162 = sshll.u32 %s153, 4
          %s163 = int_to_ptr.vmem [resolvable:$true] %s162
          %168 = dma.hbm_to_vmem [thread:$0]  %s161, 128, %s163, %s150, 32, 32, 2
        $region24: #{tpu_custom_call.1} parent=15 // pred_fallthru
          _
      $region16: #{tpu_custom_call.1} parent=5 // pred_fallthru
        _
      %p169 = scmp.le.s32.totalorder 1, %s15
      %p170 = scmp.lt.s32.totalorder %s15, 3
      %p171 = pnand %p169, %p170
      %p172 = pneg %p171
      // Predicated region
      $region25: #{tpu_custom_call.1} parent=5 // pred_check
        _
      $region26: #{tpu_custom_call.1} parent=5 // pred_check_branch
        %174 = sbr.rel (%p171) target = $region28
      $region27: #{tpu_custom_call.1} parent=5 // pred_region
        %s175 = ssub.s32 %s15, 1
        %s176 = sand.u32 %s42, 1
        %s177 = scalar_lea.sflag [#allocation6], %s176
        %s178 = sand.u32 %s42, 1
        %s179 = smul.addr %s178, 8
        %s180 = scalar_lea.vmem [#allocation5], %s179
        // Predicated region
        $region29: #{tpu_custom_call.1} parent=27 // pred_check
          %p181 = pneg %p55
        $region30: #{tpu_custom_call.1} parent=27 // pred_check_branch
          %183 = sbr.rel (%p181) target = $region32
        $region31: #{tpu_custom_call.1} parent=27 // pred_region
          %185 = dma.done %s177, 128
        $region32: #{tpu_custom_call.1} parent=27 // pred_fallthru
          _
        %s186 = sand.u32 %s70, 1
        %s187 = scalar_lea.sflag [#allocation9], %s186
        %s188 = sand.u32 %s70, 1
        %s189 = smul.addr %s188, 8
        %s190 = scalar_lea.vmem [#allocation8], %s189
        // Predicated region
        $region33: #{tpu_custom_call.1} parent=27 // pred_check
          %p191 = pneg %p83
        $region34: #{tpu_custom_call.1} parent=27 // pred_check_branch
          %193 = sbr.rel (%p191) target = $region36
        $region35: #{tpu_custom_call.1} parent=27 // pred_region
          %195 = dma.done %s187, 128
        $region36: #{tpu_custom_call.1} parent=27 // pred_fallthru
          _
        %s196 = sand.u32 %s42, 1
        %s197 = scalar_lea.sflag [#allocation6], %s196
        %s198 = sand.u32 %s42, 1
        %s199 = smul.addr %s198, 8
        %s200 = scalar_lea.vmem [#allocation5], %s199
        %p201 = pneg %p55
        %p202 = pneg %p52
        %s203 = sand.u32 %s70, 1
        %s204 = scalar_lea.sflag [#allocation9], %s203
        %s205 = sand.u32 %s70, 1
        %s206 = smul.addr %s205, 8
        %s207 = scalar_lea.vmem [#allocation8], %s206
        %p208 = pneg %p83
        %p209 = pneg %p80
        %p210 = pneg %p104
        %p211 = pneg %p101
        %p212 = scmp.eq.s32.totalorder %s24, 0
        %p213 = scmp.eq.s32.totalorder %s25, 0
        %p214 = pnand %p212, %p213
        %p215 = pneg %p214
        // Predicated region
        $region37: #{tpu_custom_call.1} parent=27 // pred_check
          _
        $region38: #{tpu_custom_call.1} parent=27 // pred_check_branch
          %217 = sbr.rel (%p214) target = $region40
        $region39: #{tpu_custom_call.1} parent=27 // pred_region
          %218 = vst [vmem:[#allocation2] sm:$0x3] 0.0
          %219 = vst [vmem:[#allocation2 + $0x2] sm:$0x3] 0.0
          %220 = vst [vmem:[#allocation2 + $0x4] sm:$0x3] 0.0
          %221 = vst [vmem:[#allocation2 + $0x6] sm:$0x3] 0.0
          %222 = vst [vmem:[#allocation3] sm:$0x3] 0.0
          %223 = vst [vmem:[#allocation3 + $0x2] sm:$0x3] 0.0
          %224 = vst [vmem:[#allocation3 + $0x4] sm:$0x3] 0.0
          %225 = vst [vmem:[#allocation3 + $0x6] sm:$0x3] 0.0
          %226 = vst [vmem:[#allocation4] sm:$0x3] 0.0
          %227 = vst [vmem:[#allocation4 + $0x2] sm:$0x3] 0.0
          %228 = vst [vmem:[#allocation4 + $0x4] sm:$0x3] 0.0
          %229 = vst [vmem:[#allocation4 + $0x6] sm:$0x3] 0.0
        $region40: #{tpu_custom_call.1} parent=27 // pred_fallthru
          _
        %v230 = vld [vmem:[%s180] sm:$0x3]
        %v231 = vld [vmem:[%s180 + $0x2] sm:$0x3]
        %v232 = vld [vmem:[%s180 + $0x4] sm:$0x3]
        %v233 = vld [vmem:[%s180 + $0x6] sm:$0x3]
        %v234 = vld [vmem:[%s190] sm:$0x3]
        %v235 = vld [vmem:[%s190 + $0x2] sm:$0x3]
        %v236 = vld [vmem:[%s190 + $0x4] sm:$0x3]
        %v237 = vld [vmem:[%s190 + $0x6] sm:$0x3]
        %vm238 = vcmask 1041408
        %v239 = vsel %vm238, %v230, -inf
        %v240 = vsel %vm238, %v231, -inf
        %v241 = vsel %vm238, %v232, -inf
        %v242 = vsel %vm238, %v233, -inf
        %v243 = vmax.f32 %v239, %v240
        %v244 = vmax.f32 %v241, %v242
        %v245 = vmax.f32 %v243, %v244
        %v246 = vsub.f32 %v230, %v245
        %v247 = vsub.f32 %v231, %v245
        %v248 = vsub.f32 %v232, %v245
        %v249 = vsub.f32 %v233, %v245
        %v250 = vmul.f32 %v246, 1.442695
        %v251 = vpow.pop %v250
        %v252 = vmul.f32 %v247, 1.442695
        %v253 = vpow.pop %v252
        %v254 = vmul.f32 %v248, 1.442695
        %v255 = vpow.pop %v254
        %v256 = vmul.f32 %v249, 1.442695
        %v257 = vpow.pop %v256
        %v258 = vsel %vm238, %v251, 0.0
        %v259 = vsel %vm238, %v253, 0.0
        %v260 = vadd.f32 %v258, %v259
        %v261 = vsel %vm238, %v255, 0.0
        %v262 = vadd.f32 %v260, %v261
        %v263 = vsel %vm238, %v257, 0.0
        %v264 = vadd.f32 %v262, %v263
        %v265 = vrcp.pop %v264
        %v266 = vmul.f32 %v264, %v265
        %v267 = vsub.f32 1.0, %v266
        %v268 = vmul.f32 %v265, %v267
        %v269 = vadd.f32 %v265, %v268
        %vm270 = vweird.f32 %v264
        %vm271 = vweird.f32 %v265
        %vm272 = vmor %vm270, %vm271
        %v273 = vsel %vm272, %v265, %v269
        %v274 = vand.u32 2147483647, %v264
        %vm275 = vcmp.eq.f32.partialorder %v274, 8.507059e+37
        %v276 = vand.u32 %v264, 2147483648
        %v277 = vor.u32 1.1754944e-38, %v276
        %v278 = vsel %vm275, %v277, %v273
        %v279 = vmul.f32 %v251, %v278
        %v280 = vmul.f32 %v253, %v278
        %v281 = vmul.f32 %v255, %v278
        %v282 = vmul.f32 %v257, %v278
        %v283 = vld [vmem:[#allocation2] sm:$0x3]
        %v284 = vld [vmem:[#allocation2 + $0x2] sm:$0x3]
        %v285 = vld [vmem:[#allocation2 + $0x4] sm:$0x3]
        %v286 = vld [vmem:[#allocation2 + $0x6] sm:$0x3]
        %v287 = vmul.f32 %v279, %v234
        %v288 = vmul.f32 %v280, %v235
        %v289 = vmul.f32 %v281, %v236
        %v290 = vmul.f32 %v282, %v237
        %v291 = vadd.f32 %v283, %v287
        %v292 = vadd.f32 %v284, %v288
        %v293 = vadd.f32 %v285, %v289
        %v294 = vadd.f32 %v286, %v290
        %295 = vst [vmem:[#allocation2] sm:$0x3] %v291
        %296 = vst [vmem:[#allocation2 + $0x2] sm:$0x3] %v292
        %297 = vst [vmem:[#allocation2 + $0x4] sm:$0x3] %v293
        %298 = vst [vmem:[#allocation2 + $0x6] sm:$0x3] %v294
        %v299 = vld [vmem:[#allocation3] sm:$0x3]
        %v300 = vld [vmem:[#allocation3 + $0x2] sm:$0x3]
        %v301 = vld [vmem:[#allocation3 + $0x4] sm:$0x3]
        %v302 = vld [vmem:[#allocation3 + $0x6] sm:$0x3]
        %v303 = vadd.f32 %v299, %v279
        %v304 = vadd.f32 %v300, %v280
        %v305 = vadd.f32 %v301, %v281
        %v306 = vadd.f32 %v302, %v282
        %307 = vst [vmem:[#allocation3] sm:$0x3] %v303
        %308 = vst [vmem:[#allocation3 + $0x2] sm:$0x3] %v304
        %309 = vst [vmem:[#allocation3 + $0x4] sm:$0x3] %v305
        %310 = vst [vmem:[#allocation3 + $0x6] sm:$0x3] %v306
        %v311 = vld [vmem:[#allocation4] sm:$0x3]
        %v312 = vld [vmem:[#allocation4 + $0x2] sm:$0x3]
        %v313 = vld [vmem:[#allocation4 + $0x4] sm:$0x3]
        %v314 = vld [vmem:[#allocation4 + $0x6] sm:$0x3]
        %v315 = vadd.f32 %v311, %v234
        %v316 = vadd.f32 %v312, %v235
        %v317 = vadd.f32 %v313, %v236
        %v318 = vadd.f32 %v314, %v237
        %319 = vst [vmem:[#allocation4] sm:$0x3] %v315
        %320 = vst [vmem:[#allocation4 + $0x2] sm:$0x3] %v316
        %321 = vst [vmem:[#allocation4 + $0x4] sm:$0x3] %v317
        %322 = vst [vmem:[#allocation4 + $0x6] sm:$0x3] %v318
        %p323 = scmp.eq.s32.totalorder %s24, 1
        %p324 = pnand %p323, %p213
        %p325 = pneg %p324
        // Predicated region
        $region41: #{tpu_custom_call.1} parent=27 // pred_check
          _
        $region42: #{tpu_custom_call.1} parent=27 // pred_check_branch
          %327 = sbr.rel (%p324) target = $region44
        $region43: #{tpu_custom_call.1} parent=27 // pred_region
          %v328 = vld [vmem:[#allocation2 + $0x2] sm:$0x3]
          %v329 = vld [vmem:[#allocation2 + $0x4] sm:$0x3]
          %v330 = vld [vmem:[#allocation2 + $0x6] sm:$0x3]
          %v331 = vsel %vm238, %v328, 0.0
          %332 = vadd.xlane.f32.xlu0 %v331
          %v333 = vpop.xlane.xlu0 %332
          %v334 = vsel %vm238, %v329, 0.0
          %335 = vadd.xlane.f32.xlu0 %v334
          %v336 = vpop.xlane.xlu0 %335
          %v337 = vsel %vm238, %v330, 0.0
          %338 = vadd.xlane.f32.xlu0 %v337
          %v339 = vpop.xlane.xlu0 %338
          %v340 = vsel %vm238, %v333, 0.0
          %v341 = vrot.slane %v340, 4
          %v342 = vadd.f32 %v340, %v341
          %v343 = vrot.slane %v342, 2
          %v344 = vadd.f32 %v342, %v343
          %v345 = vrot.slane %v344, 1
          %v346 = vadd.f32 %v344, %v345
          %v347 = vsel %vm238, %v336, 0.0
          %v348 = vrot.slane %v347, 4
          %v349 = vadd.f32 %v347, %v348
          %v350 = vrot.slane %v349, 2
          %v351 = vadd.f32 %v349, %v350
          %v352 = vrot.slane %v351, 1
          %v353 = vadd.f32 %v351, %v352
          %v354 = vsel %vm238, %v339, 0.0
          %v355 = vrot.slane %v354, 4
          %v356 = vadd.f32 %v354, %v355
          %v357 = vrot.slane %v356, 2
          %v358 = vadd.f32 %v356, %v357
          %v359 = vrot.slane %v358, 1
          %v360 = vadd.f32 %v358, %v359
          %v361 = vld [vmem:[#allocation3 + $0x2] sm:$0x3]
          %v362 = vld [vmem:[#allocation3 + $0x4] sm:$0x3]
          %v363 = vld [vmem:[#allocation3 + $0x6] sm:$0x3]
          %v364 = vsel %vm238, %v361, 0.0
          %365 = vadd.xlane.f32.xlu0 %v364
          %v366 = vpop.xlane.xlu0 %365
          %v367 = vsel %vm238, %v362, 0.0
          %368 = vadd.xlane.f32.xlu0 %v367
          %v369 = vpop.xlane.xlu0 %368
          %v370 = vsel %vm238, %v363, 0.0
          %371 = vadd.xlane.f32.xlu0 %v370
          %v372 = vpop.xlane.xlu0 %371
          %v373 = vsel %vm238, %v366, 0.0
          %v374 = vrot.slane %v373, 4
          %v375 = vadd.f32 %v373, %v374
          %v376 = vrot.slane %v375, 2
          %v377 = vadd.f32 %v375, %v376
          %v378 = vrot.slane %v377, 1
          %v379 = vadd.f32 %v377, %v378
          %v380 = vsel %vm238, %v369, 0.0
          %v381 = vrot.slane %v380, 4
          %v382 = vadd.f32 %v380, %v381
          %v383 = vrot.slane %v382, 2
          %v384 = vadd.f32 %v382, %v383
          %v385 = vrot.slane %v384, 1
          %v386 = vadd.f32 %v384, %v385
          %v387 = vsel %vm238, %v372, 0.0
          %v388 = vrot.slane %v387, 4
          %v389 = vadd.f32 %v387, %v388
          %v390 = vrot.slane %v389, 2
          %v391 = vadd.f32 %v389, %v390
          %v392 = vrot.slane %v391, 1
          %v393 = vadd.f32 %v391, %v392
          %v394 = vld [vmem:[#allocation4 + $0x2] sm:$0x3]
          %v395 = vld [vmem:[#allocation4 + $0x4] sm:$0x3]
          %v396 = vld [vmem:[#allocation4 + $0x6] sm:$0x3]
          %v397 = vsel %vm238, %v394, 0.0
          %398 = vadd.xlane.f32.xlu0 %v397
          %v399 = vpop.xlane.xlu0 %398
          %v400 = vsel %vm238, %v395, 0.0
          %401 = vadd.xlane.f32.xlu0 %v400
          %v402 = vpop.xlane.xlu0 %401
          %v403 = vsel %vm238, %v396, 0.0
          %404 = vadd.xlane.f32.xlu0 %v403
          %v405 = vpop.xlane.xlu0 %404
          %v406 = vsel %vm238, %v399, 0.0
          %v407 = vrot.slane %v406, 4
          %v408 = vadd.f32 %v406, %v407
          %v409 = vrot.slane %v408, 2
          %v410 = vadd.f32 %v408, %v409
          %v411 = vrot.slane %v410, 1
          %v412 = vadd.f32 %v410, %v411
          %v413 = vsel %vm238, %v402, 0.0
          %v414 = vrot.slane %v413, 4
          %v415 = vadd.f32 %v413, %v414
          %v416 = vrot.slane %v415, 2
          %v417 = vadd.f32 %v415, %v416
          %v418 = vrot.slane %v417, 1
          %v419 = vadd.f32 %v417, %v418
          %v420 = vsel %vm238, %v405, 0.0
          %v421 = vrot.slane %v420, 4
          %v422 = vadd.f32 %v420, %v421
          %v423 = vrot.slane %v422, 2
          %v424 = vadd.f32 %v422, %v423
          %v425 = vrot.slane %v424, 1
          %v426 = vadd.f32 %v424, %v425
          %v427 = vadd.f32 %v379, %v412
          %v428 = vadd.f32 %v386, %v419
          %v429 = vadd.f32 %v393, %v426
          %v430 = vsub.f32 %v427, %v346
          %v431 = vsub.f32 %v428, %v353
          %v432 = vsub.f32 %v429, %v360
          %v433 = vadd.f32 %v430, 1e-07
          %v434 = vadd.f32 %v431, 1e-07
          %v435 = vadd.f32 %v432, 1e-07
          %v436 = vadd.f32 %v346, 1e-07
          %v437 = vadd.f32 %v353, 1e-07
          %v438 = vadd.f32 %v360, 1e-07
          %v439 = vrcp.pop %v433
          %v440 = vmul.f32 %v433, %v439
          %v441 = vsub.f32 1.0, %v440
          %v442 = vmul.f32 %v439, %v441
          %v443 = vadd.f32 %v439, %v442
          %vm444 = vweird.f32 %v433
          %vm445 = vweird.f32 %v439
          %vm446 = vmor %vm444, %vm445
          %v447 = vsel %vm446, %v439, %v443
          %v448 = vand.u32 2147483647, %v433
          %vm449 = vcmp.eq.f32.partialorder %v448, 8.507059e+37
          %v450 = vand.u32 %v433, 2147483648
          %v451 = vor.u32 1.1754944e-38, %v450
          %v452 = vsel %vm449, %v451, %v447
          %v453 = vmul.f32 %v436, %v452
          %v454 = vrcp.pop %v434
          %v455 = vmul.f32 %v434, %v454
          %v456 = vsub.f32 1.0, %v455
          %v457 = vmul.f32 %v454, %v456
          %v458 = vadd.f32 %v454, %v457
          %vm459 = vweird.f32 %v434
          %vm460 = vweird.f32 %v454
          %vm461 = vmor %vm459, %vm460
          %v462 = vsel %vm461, %v454, %v458
          %v463 = vand.u32 2147483647, %v434
          %vm464 = vcmp.eq.f32.partialorder %v463, 8.507059e+37
          %v465 = vand.u32 %v434, 2147483648
          %v466 = vor.u32 1.1754944e-38, %v465
          %v467 = vsel %vm464, %v466, %v462
          %v468 = vmul.f32 %v437, %v467
          %v469 = vrcp.pop %v435
          %v470 = vmul.f32 %v435, %v469
          %v471 = vsub.f32 1.0, %v470
          %v472 = vmul.f32 %v469, %v471
          %v473 = vadd.f32 %v469, %v472
          %vm474 = vweird.f32 %v435
          %vm475 = vweird.f32 %v469
          %vm476 = vmor %vm474, %vm475
          %v477 = vsel %vm476, %v469, %v473
          %v478 = vand.u32 2147483647, %v435
          %vm479 = vcmp.eq.f32.partialorder %v478, 8.507059e+37
          %v480 = vand.u32 %v435, 2147483648
          %v481 = vor.u32 1.1754944e-38, %v480
          %v482 = vsel %vm479, %v481, %v477
          %v483 = vmul.f32 %v438, %v482
          %v484 = vsub.f32 1.0, %v453
          %v485 = vsub.f32 1.0, %v468
          %v486 = vsub.f32 1.0, %v483
          %vm487 = vcmask 0
          %v488 = vsel %vm487, %v484, 0.0
          %v489 = vadd.f32 %v488, 0.0
          %v490 = vsel %vm487, %v485, 0.0
          %v491 = vadd.f32 %v489, %v490
          %v492 = vsel %vm487, %v486, 0.0
          %v493 = vadd.f32 %v491, %v492
          %494 = vadd.xlane.f32.xlu0 %v493
          %v495 = vpop.xlane.xlu0 %494
          %v496 = vrot.slane %v495, 4
          %v497 = vadd.f32 %v495, %v496
          %v498 = vrot.slane %v497, 2
          %v499 = vadd.f32 %v497, %v498
          %v500 = vrot.slane %v499, 1
          %v501 = vadd.f32 %v499, %v500
          %s502 = vtos %v501
          %s503 = scalar_lea.smem [#allocation10], 0
          %504 = sst [smem:[%s503]] %s502
        $region44: #{tpu_custom_call.1} parent=27 // pred_fallthru
          _
        // Predicated region
        $region45: #{tpu_custom_call.1} parent=27 // pred_check
          %p505 = pneg %p101
        $region46: #{tpu_custom_call.1} parent=27 // pred_check_branch
          %507 = sbr.rel (%p505) target = $region48
        $region47: #{tpu_custom_call.1} parent=27 // pred_region
          %509 = vsyncadd [#allocation7], 0
          %s511 = sshll.u32 %s2, 4
          %s512 = int_to_ptr.hbm [resolvable:$true] %s511
          %514 = dma.smem_to_hbm [#allocation10], 16, %s512, [#allocation7]
        $region48: #{tpu_custom_call.1} parent=27 // pred_fallthru
          _
        // Predicated region
        $region49: #{tpu_custom_call.1} parent=27 // pred_check
          %p515 = pneg %p101
        $region50: #{tpu_custom_call.1} parent=27 // pred_check_branch
          %517 = sbr.rel (%p515) target = $region52
        $region51: #{tpu_custom_call.1} parent=27 // pred_region
          %519 = dma.done [#allocation7], 16
        $region52: #{tpu_custom_call.1} parent=27 // pred_fallthru
          _
        %520 = sfence
      $region28: #{tpu_custom_call.1} parent=5 // pred_fallthru
        _
      %p521 = scmp.le.s32.totalorder 2, %s15
      // Predicated region
      $region53: #{tpu_custom_call.1} parent=5 // pred_check
        %p522 = pneg %p521
      $region54: #{tpu_custom_call.1} parent=5 // pred_check_branch
        %524 = sbr.rel (%p522) target = $region56
      $region55: #{tpu_custom_call.1} parent=5 // pred_region
        %s525 = ssub.s32 %s15, 2
      $region56: #{tpu_custom_call.1} parent=5 // pred_fallthru
        _
    $region6: #{tpu_custom_call.1} parent=1 // loop_footer
      %s19 = sadd.s32 1, %s15
    $region7: #{tpu_custom_call.1} parent=1 // loop_footer_branch
      %14 = sbr.rel target = $region3
    $region8: #{tpu_custom_call.1} parent=1 // loop_exit
      _
    %526 = vsyncpa [#allocation6], 1
    %s527 = scalar_lea.sflag [#allocation6], 1
    %528 = vsyncpa %s527, 1
    %529 = vsyncpa [#allocation9], 1
    %s530 = scalar_lea.sflag [#allocation9], 1
    %531 = vsyncpa %s530, 1
    %532 = vsyncpa [#allocation7], 1
    %s533 = scalar_lea.sflag [#allocation7], 1
    %534 = vsyncpa %s533, 1

</llo_original>
